<compile_context>
chip_gen: v5e
topology: v5e:2x2
jax: 0.10.0
libtpu: 0.0.40
codegen_flags: <defaults>
</compile_context>

<pallas_src>
import jax
import jax.numpy as jnp
import numpy as np
from jax.experimental import pallas as pl
from jax.experimental.pallas import tpu as pltpu


# ----------------------------------------------------------------------------
# Model dimensions (match the PyTorch module defaults).
# ----------------------------------------------------------------------------
HIDDEN = 64                       # hidden_size
NUM_OBJ = 1                       # num_objectives (kernel is specialized to 1)
H_SR = 32                         # step_reward / outcome head hidden width
H_CONF = 16                       # confidence head hidden width

FUSED1 = H_SR + H_CONF            # 48: fused layer-1 width [step_reward | conf]

# Packed-bias row layout (columns of the (1, B_COLS) f32 array).
B1_OFF = 0                        # fused layer-1 bias            [0, 48)
B2_OFF = FUSED1                   # fused layer-2 bias            [48, 50)
BO1_OFF = B2_OFF + NUM_OBJ + 1    # outcome layer-1 bias          [50, 82)
BO2_OFF = BO1_OFF + H_SR          # outcome layer-2 bias          [82, 83)
WO2_OFF = BO2_OFF + NUM_OBJ       # outcome layer-2 weight row    [83, 115)
B_COLS = WO2_OFF + H_SR           # 115


# ----------------------------------------------------------------------------
# Kernel
# ----------------------------------------------------------------------------
def _prm_kernel(x_ref, w1_ref, w2_ref, b_ref, sr_ref, conf_ref, fr_ref):
    tb, s, h = x_ref.shape

    x = x_ref[...]                                    # (TB, S, H) f32
    # Free view when S % 8 == 0 (tile groups line up); otherwise a correct
    # (but slower) relayout.
    x2d = x.reshape(tb * s, h)

    # ---- fused step_reward + confidence heads ------------------------------
    # MXU operands are cast to bf16 (f32 accumulation): single MXU pass, so
    # the matmul stays hidden under the input DMA on every TPU generation.
    h1 = jnp.dot(x2d.astype(jnp.bfloat16), w1_ref[:, :FUSED1],
                 preferred_element_type=jnp.float32)
    h1 = jnp.maximum(h1 + b_ref[:, B1_OFF:B1_OFF + FUSED1], 0.0)     # (TB*S, 48)

    out2 = jnp.dot(h1.astype(jnp.bfloat16), w2_ref[...],
                   preferred_element_type=jnp.float32)
    out2 = out2 + b_ref[:, B2_OFF:B2_OFF + NUM_OBJ + 1]              # (TB*S, 2)

    sr = out2[:, :NUM_OBJ]                                           # (TB*S, 1)
    conf = jax.nn.sigmoid(out2[:, NUM_OBJ:NUM_OBJ + 1])              # (TB*S, 1)

    # Lane-dense stores: one full-lane (1, 1, TB*S) slab per output so the
    # store path is unmasked and the writeback DMA is contiguous.
    sr_ref[...] = sr.reshape(1, 1, tb * s).astype(sr_ref.dtype)
    conf_ref[...] = conf.reshape(1, 1, tb * s).astype(conf_ref.dtype)

    # ---- softmax over steps -------------------------------------------------
    # INVARIANT: conf is a sigmoid output in (0, 1), so exp cannot overflow and
    # the usual max-subtraction is skipped.  Do NOT feed raw logits here.
    # Exact reciprocal (review item): the denominator is only (TB, 1, 1).
    e = jnp.exp(conf).reshape(tb, s, 1)                              # (TB, S, 1)
    weights = e * (1.0 / jnp.sum(e, axis=1, keepdims=True))          # (TB, S, 1)

    # ---- confidence-weighted pooling + outcome head -------------------------
    weighted = jnp.sum(x * weights, axis=1)                          # (TB, H) f32
    h_o = jnp.dot(weighted.astype(jnp.bfloat16), w1_ref[:, FUSED1:],
                  preferred_element_type=jnp.float32)
    h_o = jnp.maximum(h_o + b_ref[:, BO1_OFF:BO1_OFF + H_SR], 0.0)   # (TB, 32)

    # Outcome layer-2 is (TB, 32) x (32, 1): do it on the VPU (multiply + lane
    # reduce, full f32) instead of lighting 1/128 of the MXU.
    final = jnp.sum(h_o * b_ref[:, WO2_OFF:WO2_OFF + H_SR],
                    axis=-1, keepdims=True)
    final = final + b_ref[:, BO2_OFF:BO2_OFF + NUM_OBJ]              # (TB, 1)
    fr_ref[...] = final.reshape(1, 1, tb).astype(fr_ref.dtype)


# ----------------------------------------------------------------------------
# Parameter packing: 12 tiny tensors -> 3 resident buffers.
# ----------------------------------------------------------------------------
def _pack_params(p):
    # Layer-1 weights: [ step_reward (32) | confidence (16) | outcome (32) ].
    w1_pack = jnp.concatenate([p["w_sr1"], p["w_c1"], p["w_o1"]],
                              axis=1).astype(jnp.bfloat16)            # (64, 80)
    # Fused layer-2 weights (48, 2), block-diagonal:
    #   col 0 <- step_reward layer-2 (rows 0:32), col 1 <- confidence (rows 32:48).
    w2_pack = jnp.zeros((FUSED1, NUM_OBJ + 1), jnp.float32)
    w2_pack = w2_pack.at[:H_SR, :NUM_OBJ].set(p["w_sr2"])
    w2_pack = w2_pack.at[H_SR:, NUM_OBJ:].set(p["w_c2"])
    w2_pack = w2_pack.astype(jnp.bfloat16)                            # (48, 2)
    # Biases + the 32-wide outcome layer-2 weight row, all f32, lane-contiguous.
    b_pack = jnp.concatenate(
        [p["b_sr1"], p["b_c1"], p["b_sr2"], p["b_c2"],
         p["b_o1"], p["b_o2"], p["w_o2"].reshape(1, H_SR)], axis=1)   # (1, 115)
    return w1_pack, w2_pack, b_pack


# ----------------------------------------------------------------------------
# Generation-aware tiling.
# ----------------------------------------------------------------------------
def _device_profile():
    """(num_tensorcores, vmem_block_budget, vmem_limit_bytes) -- best effort."""
    kind = ""
    try:
        kind = jax.devices()[0].device_kind.lower()
    except Exception:  # pragma: no cover - CPU / interpret fallbacks
        pass
    two_core = any(tag in kind for tag in ("v4", "v5p", "v7", "7x"))
    if ("v7" in kind) or ("7x" in kind):
        # v7x: 64 MiB VMEM per TensorCore -- tighter budget, leave headroom.
        return 2, 24 << 20, 44 << 20
    # v5e/v6e (and v4/v5p): 128 MiB physical VMEM.
    return (2 if two_core else 1), 36 << 20, 64 << 20


def _choose_batch_tile(B, S, num_cores, tb_max, vmem_budget):
    """Pick the per-grid-step batch tile TB.

    Cost model: ~8 lane-padded f32 (TB, S, 128) slabs live at peak (x double
    buffer, bf16 copy, h1, out2, softmax chain, x*weights product, outputs).
    Single-TC chips use the fewest steps that fit; dual-TC chips get >= 2
    tiles, rounded so the per-core work is balanced.
    """
    row_cost = 8 * S * 128 * 4
    cap = min(tb_max, max(16, vmem_budget // row_cost))
    cap -= cap % 16
    cap = max(cap, 16)
    if B <= 16 or (num_cores <= 1 and B <= cap):
        return B
    n = max(num_cores, pl.cdiv(B, cap))
    if num_cores > 1 and n % num_cores:
        n = pl.cdiv(n, num_cores) * num_cores
    tb = pl.cdiv(pl.cdiv(B, n), 8) * 8
    return max(8, min(tb, cap))


# ----------------------------------------------------------------------------
# Forward wrapper
# ----------------------------------------------------------------------------
def prm_forward(step_sequence, params, *, tb_max=1024, interpret=False):
    """Pallas forward.  step_sequence: (B, S, H) float32."""
    B, S, H = step_sequence.shape
    assert H == HIDDEN

    w1_pack, w2_pack, b_pack = _pack_params(params)

    num_cores, vmem_budget, vmem_limit = _device_profile()
    TB = _choose_batch_tile(B, S, num_cores, tb_max, vmem_budget)
    n_tiles = pl.cdiv(B, TB)
    # No wrapper-side padding: the last input block may be partial; Pallas
    # masks it, and padded rows only produce per-row garbage we slice away.

    out_shapes = (
        jax.ShapeDtypeStruct((n_tiles, 1, TB * S), jnp.float32),   # step_rewards
        jax.ShapeDtypeStruct((n_tiles, 1, TB * S), jnp.float32),   # step_confidences
        jax.ShapeDtypeStruct((n_tiles, 1, TB), jnp.float32),       # final_reward
    )

    grid_spec = pltpu.PrefetchScalarGridSpec(
        num_scalar_prefetch=0,
        grid=(n_tiles,),
        in_specs=[
            pl.BlockSpec((TB, S, H), lambda b: (b, 0, 0)),
            pl.BlockSpec(w1_pack.shape, lambda b: (0, 0)),
            pl.BlockSpec(w2_pack.shape, lambda b: (0, 0)),
            pl.BlockSpec(b_pack.shape, lambda b: (0, 0)),
        ],
        out_specs=[
            pl.BlockSpec((1, 1, TB * S), lambda b: (b, 0, 0)),
            pl.BlockSpec((1, 1, TB * S), lambda b: (b, 0, 0)),
            pl.BlockSpec((1, 1, TB), lambda b: (b, 0, 0)),
        ],
    )

    sr_t, conf_t, fr_t = pl.pallas_call(
        _prm_kernel,
        out_shape=out_shapes,
        grid_spec=grid_spec,
        compiler_params=pltpu.CompilerParams(
            dimension_semantics=("parallel",),
            vmem_limit_bytes=vmem_limit,
        ),
        interpret=interpret,
    )(step_sequence, w1_pack, w2_pack, b_pack)

    # Back to the PyTorch layout (pure glue: contiguous reshapes + slice).
    step_rewards = sr_t.reshape(n_tiles * TB, S)[:B, :, None]     # (B, S, 1)
    step_confidences = conf_t.reshape(n_tiles * TB, S)[:B]        # (B, S)
    final_reward = fr_t.reshape(n_tiles * TB, NUM_OBJ)[:B]        # (B, 1)
    return step_rewards, final_reward, step_confidences


# ----------------------------------------------------------------------------
# Deterministic parameter init (PyTorch-Linear-style uniform(+-1/sqrt(fan_in)),
# weights stored as (in_features, out_features), biases as (1, out_features)).
# ----------------------------------------------------------------------------
def init_params(key):
    def linear(key, fan_in, fan_out):
        kw, kb = jax.random.split(key)
        bound = 1.0 / np.sqrt(fan_in)
        w = jax.random.uniform(kw, (fan_in, fan_out), jnp.float32, -bound, bound)
        b = jax.random.uniform(kb, (1, fan_out), jnp.float32, -bound, bound)
        return w, b

    keys = jax.random.split(key, 6)
    w_sr1, b_sr1 = linear(keys[0], HIDDEN, H_SR)
    w_sr2, b_sr2 = linear(keys[1], H_SR, NUM_OBJ)
    w_o1, b_o1 = linear(keys[2], HIDDEN, H_SR)
    w_o2, b_o2 = linear(keys[3], H_SR, NUM_OBJ)
    w_c1, b_c1 = linear(keys[4], HIDDEN, H_CONF)
    w_c2, b_c2 = linear(keys[5], H_CONF, 1)
    return dict(
        w_sr1=w_sr1, b_sr1=b_sr1, w_sr2=w_sr2, b_sr2=b_sr2,
        w_o1=w_o1, b_o1=b_o1, w_o2=w_o2, b_o2=b_o2,
        w_c1=w_c1, b_c1=b_c1, w_c2=w_c2, b_c2=b_c2,
    )


# ----------------------------------------------------------------------------
# Pure-JAX references.
#   emulate_mxu_bf16=True models the kernel's bf16 MXU operands exactly (f32
#   accumulation), so the comparison can be tight (accumulation order +
#   transcendental ulps only).  emulate_mxu_bf16=False is the true-f32 module.
# ----------------------------------------------------------------------------
def _bf16_round(a):
    return a.astype(jnp.bfloat16).astype(jnp.float32)


def prm_reference(x, p, *, emulate_mxu_bf16=False):
    P = jax.lax.Precision.HIGHEST
    r = _bf16_round if emulate_mxu_bf16 else (lambda a: a)

    def head(v, w1, b1, w2, b2):
        h = jnp.maximum(jnp.dot(r(v), r(w1), precision=P) + b1, 0.0)
        return jnp.dot(r(h), r(w2), precision=P) + b2

    step_rewards = head(x, p["w_sr1"], p["b_sr1"], p["w_sr2"], p["b_sr2"])
    conf = jax.nn.sigmoid(
        head(x, p["w_c1"], p["b_c1"], p["w_c2"], p["b_c2"]))[..., 0]   # (B, S)
    weights = jax.nn.softmax(conf, axis=1)
    weighted = jnp.sum(x * weights[..., None], axis=1)                  # (B, H)
    h_o = jnp.maximum(
        jnp.dot(r(weighted), r(p["w_o1"]), precision=P) + p["b_o1"], 0.0)
    final = jnp.dot(h_o, p["w_o2"], precision=P) + p["b_o2"]            # f32 path
    return step_rewards, final, conf


if __name__ == "__main__":
    key = jax.random.PRNGKey(0)
    k_x, k_p, k_x2 = jax.random.split(key, 3)

    params = init_params(k_p)
    fwd = jax.jit(prm_forward)

    def check(outs, x_in):
        sr_, fr_, cf_ = [np.asarray(o) for o in outs]
        # Tight check vs a reference that models the kernel's bf16 MXU operands
        # exactly (residual = accumulation order + transcendental ulps).
        r_sr, r_fr, r_cf = prm_reference(x_in, params, emulate_mxu_bf16=True)
        np.testing.assert_allclose(sr_, np.asarray(r_sr), rtol=1e-3, atol=1e-3)
        np.testing.assert_allclose(cf_, np.asarray(r_cf), rtol=1e-3, atol=1e-3)
        np.testing.assert_allclose(fr_, np.asarray(r_fr), rtol=1e-3, atol=1e-3)
        # Looser sanity vs the true-f32 module semantics (bound on bf16 operand
        # rounding in the MXU matmuls).
        f_sr, f_fr, f_cf = prm_reference(x_in, params)
        np.testing.assert_allclose(sr_, np.asarray(f_sr), rtol=5e-2, atol=5e-2)
        np.testing.assert_allclose(cf_, np.asarray(f_cf), rtol=5e-2, atol=5e-2)
        np.testing.assert_allclose(fr_, np.asarray(f_fr), rtol=5e-2, atol=5e-2)

    # Small shapes consistent with the module: batch=2, num_steps=8, hidden=64.
    B, S = 2, 8
    x = jax.random.normal(k_x, (B, S, HIDDEN), jnp.float32)
    step_rewards, final_reward, step_conf = jax.block_until_ready(fwd(x, params))
    assert step_rewards.shape == (B, S, NUM_OBJ)
    assert final_reward.shape == (B, NUM_OBJ)
    assert step_conf.shape == (B, S)
    check((step_rewards, final_reward, step_conf), x)

    # Larger, non-divisible batch: single full block on 1-TC chips, 2 balanced
    # tiles on 2-TC chips -- exercises the generation-aware tiling.
    B2 = 37
    x2 = jax.random.normal(k_x2, (B2, S, HIDDEN), jnp.float32)
    outs2 = jax.block_until_ready(fwd(x2, params))
    check(outs2, x2)

    # Force multi-tile + partial final input block (no wrapper-side padding).
    fwd_tiled = jax.jit(lambda a, p: prm_forward(a, p, tb_max=16))
    outs3 = jax.block_until_ready(fwd_tiled(x2, params))
    check(outs3, x2)

    print("KERNEL_OK")
</pallas_src>

<mosaic_0001>
module attributes {stable_mosaic.version = 11 : i64} {
  func.func @_prm_kernel(%arg0: i32, %arg1: memref<2x8x64xf32, #tpu.memory_space<vmem>>, %arg2: memref<64x80xbf16, #tpu.memory_space<vmem>>, %arg3: memref<48x2xbf16, #tpu.memory_space<vmem>>, %arg4: memref<1x115xf32, #tpu.memory_space<vmem>>, %arg5: memref<1x1x16xf32, #tpu.memory_space<vmem>>, %arg6: memref<1x1x16xf32, #tpu.memory_space<vmem>>, %arg7: memref<1x1x2xf32, #tpu.memory_space<vmem>>) attributes {dimension_semantics = [#tpu.dimension_semantics<parallel>], iteration_bounds = array<i64: 1>, scalar_prefetch = 0 : i64, scratch_operands = 0 : i64, tpu.core_type = #tpu.core_type<tc>, window_params = [{transform_indices = @transform_0, window_bounds = array<i64: 2, 8, 64>}, {pipeline_mode = #tpu.pipeline_mode<synchronous>, transform_indices = @transform_1, window_bounds = array<i64: 64, 80>}, {pipeline_mode = #tpu.pipeline_mode<synchronous>, transform_indices = @transform_2, window_bounds = array<i64: 48, 2>}, {pipeline_mode = #tpu.pipeline_mode<synchronous>, transform_indices = @transform_3, window_bounds = array<i64: 1, 115>}, {transform_indices = @transform_4, window_bounds = array<i64: 1, 1, 16>}, {transform_indices = @transform_5, window_bounds = array<i64: 1, 1, 16>}, {transform_indices = @transform_6, window_bounds = array<i64: 1, 1, 2>}]} {
    %c0 = arith.constant 0 : index
    %c0_0 = arith.constant 0 : index
    %c0_1 = arith.constant 0 : index
    %0 = vector.load %arg1[%c0, %c0_0, %c0_1] : memref<2x8x64xf32, #tpu.memory_space<vmem>>, vector<2x8x64xf32>
    %1 = vector.shape_cast %0 : vector<2x8x64xf32> to vector<16x64xf32>
    %2 = arith.truncf %1 : vector<16x64xf32> to vector<16x64xbf16>
    %c0_2 = arith.constant 0 : index
    %c0_3 = arith.constant 0 : index
    %3 = vector.load %arg2[%c0_2, %c0_3] : memref<64x80xbf16, #tpu.memory_space<vmem>>, vector<64x48xbf16>
    %cst = arith.constant dense<0.000000e+00> : vector<16x48xf32>
    %4 = tpu.matmul %2, %3, %cst {dimension_numbers = #tpu.dot_dimension_numbers<[1], [0], [0], [1], [0, 0, 1, 1], [], []>} : vector<16x64xbf16>, vector<64x48xbf16>, vector<16x48xf32> -> vector<16x48xf32>
    %c0_4 = arith.constant 0 : index
    %c0_5 = arith.constant 0 : index
    %5 = vector.load %arg4[%c0_4, %c0_5] : memref<1x115xf32, #tpu.memory_space<vmem>>, vector<1x48xf32>
    %6 = vector.broadcast %5 : vector<1x48xf32> to vector<16x48xf32>
    %7 = arith.addf %4, %6 : vector<16x48xf32>
    %cst_6 = arith.constant 0.000000e+00 : f32
    %8 = vector.broadcast %cst_6 : f32 to vector<16x48xf32>
    %9 = arith.maximumf %7, %8 : vector<16x48xf32>
    %10 = arith.truncf %9 : vector<16x48xf32> to vector<16x48xbf16>
    %c0_7 = arith.constant 0 : index
    %c0_8 = arith.constant 0 : index
    %11 = vector.load %arg3[%c0_7, %c0_8] : memref<48x2xbf16, #tpu.memory_space<vmem>>, vector<48x2xbf16>
    %cst_9 = arith.constant dense<0.000000e+00> : vector<16x2xf32>
    %12 = tpu.matmul %10, %11, %cst_9 {dimension_numbers = #tpu.dot_dimension_numbers<[1], [0], [0], [1], [0, 0, 1, 1], [], []>} : vector<16x48xbf16>, vector<48x2xbf16>, vector<16x2xf32> -> vector<16x2xf32>
    %c0_10 = arith.constant 0 : index
    %c48 = arith.constant 48 : index
    %13 = vector.load %arg4[%c0_10, %c48] : memref<1x115xf32, #tpu.memory_space<vmem>>, vector<1x2xf32>
    %14 = vector.broadcast %13 : vector<1x2xf32> to vector<16x2xf32>
    %15 = arith.addf %12, %14 : vector<16x2xf32>
    %16 = vector.extract_strided_slice %15 {offsets = [0, 0], sizes = [16, 1], strides = [1, 1]} : vector<16x2xf32> to vector<16x1xf32>
    %17 = vector.extract_strided_slice %15 {offsets = [0, 1], sizes = [16, 1], strides = [1, 1]} : vector<16x2xf32> to vector<16x1xf32>
    %18 = arith.negf %17 : vector<16x1xf32>
    %19 = math.exp %18 : vector<16x1xf32>
    %cst_11 = arith.constant 1.000000e+00 : f32
    %20 = vector.broadcast %cst_11 : f32 to vector<16x1xf32>
    %21 = arith.addf %20, %19 : vector<16x1xf32>
    %22 = arith.divf %20, %21 : vector<16x1xf32>
    %23 = vector.shape_cast %16 : vector<16x1xf32> to vector<1x1x16xf32>
    %c0_12 = arith.constant 0 : index
    %c0_13 = arith.constant 0 : index
    %c0_14 = arith.constant 0 : index
    %24 = vector.load %arg5[%c0_12, %c0_13, %c0_14] : memref<1x1x16xf32, #tpu.memory_space<vmem>>, vector<1x1x16xf32>
    tpu.vector_store %arg5[%c0_12, %c0_13, %c0_14], %23 {strides = array<i32>} : memref<1x1x16xf32, #tpu.memory_space<vmem>>, vector<1x1x16xf32>,
    %25 = vector.shape_cast %22 : vector<16x1xf32> to vector<1x1x16xf32>
    %c0_15 = arith.constant 0 : index
    %c0_16 = arith.constant 0 : index
    %c0_17 = arith.constant 0 : index
    %26 = vector.load %arg6[%c0_15, %c0_16, %c0_17] : memref<1x1x16xf32, #tpu.memory_space<vmem>>, vector<1x1x16xf32>
    tpu.vector_store %arg6[%c0_15, %c0_16, %c0_17], %25 {strides = array<i32>} : memref<1x1x16xf32, #tpu.memory_space<vmem>>, vector<1x1x16xf32>,
    %27 = math.exp %22 : vector<16x1xf32>
    %28 = vector.shape_cast %27 : vector<16x1xf32> to vector<2x8x1xf32>
    %cst_18 = arith.constant dense<0.000000e+00> : vector<2x1xf32>
    %29 = vector.multi_reduction <add>, %28, %cst_18 [1] : vector<2x8x1xf32> to vector<2x1xf32>
    %30 = vector.shape_cast %29 : vector<2x1xf32> to vector<2x1x1xf32>
    %cst_19 = arith.constant 1.000000e+00 : f32
    %31 = vector.broadcast %cst_19 : f32 to vector<2x1x1xf32>
    %32 = arith.divf %31, %30 : vector<2x1x1xf32>
    %33 = vector.broadcast %32 : vector<2x1x1xf32> to vector<2x8x1xf32>
    %34 = arith.mulf %28, %33 : vector<2x8x1xf32>
    %35 = vector.broadcast %34 : vector<2x8x1xf32> to vector<2x8x64xf32>
    %36 = arith.mulf %0, %35 : vector<2x8x64xf32>
    %cst_20 = arith.constant dense<0.000000e+00> : vector<2x64xf32>
    %37 = vector.multi_reduction <add>, %36, %cst_20 [1] : vector<2x8x64xf32> to vector<2x64xf32>
    %38 = arith.truncf %37 : vector<2x64xf32> to vector<2x64xbf16>
    %c0_21 = arith.constant 0 : index
    %c48_22 = arith.constant 48 : index
    %39 = vector.load %arg2[%c0_21, %c48_22] : memref<64x80xbf16, #tpu.memory_space<vmem>>, vector<64x32xbf16>
    %cst_23 = arith.constant dense<0.000000e+00> : vector<2x32xf32>
    %40 = tpu.matmul %38, %39, %cst_23 {dimension_numbers = #tpu.dot_dimension_numbers<[1], [0], [0], [1], [0, 0, 1, 1], [], []>} : vector<2x64xbf16>, vector<64x32xbf16>, vector<2x32xf32> -> vector<2x32xf32>
    %c0_24 = arith.constant 0 : index
    %c50 = arith.constant 50 : index
    %41 = vector.load %arg4[%c0_24, %c50] : memref<1x115xf32, #tpu.memory_space<vmem>>, vector<1x32xf32>
    %42 = vector.broadcast %41 : vector<1x32xf32> to vector<2x32xf32>
    %43 = arith.addf %40, %42 : vector<2x32xf32>
    %cst_25 = arith.constant 0.000000e+00 : f32
    %44 = vector.broadcast %cst_25 : f32 to vector<2x32xf32>
    %45 = arith.maximumf %43, %44 : vector<2x32xf32>
    %c0_26 = arith.constant 0 : index
    %c83 = arith.constant 83 : index
    %46 = vector.load %arg4[%c0_26, %c83] : memref<1x115xf32, #tpu.memory_space<vmem>>, vector<1x32xf32>
    %47 = vector.broadcast %46 : vector<1x32xf32> to vector<2x32xf32>
    %48 = arith.mulf %45, %47 : vector<2x32xf32>
    %cst_27 = arith.constant dense<0.000000e+00> : vector<2xf32>
    %49 = vector.multi_reduction <add>, %48, %cst_27 [1] : vector<2x32xf32> to vector<2xf32>
    %50 = vector.shape_cast %49 : vector<2xf32> to vector<2x1xf32>
    %c0_28 = arith.constant 0 : index
    %c82 = arith.constant 82 : index
    %51 = vector.load %arg4[%c0_28, %c82] : memref<1x115xf32, #tpu.memory_space<vmem>>, vector<1x1xf32>
    %52 = vector.broadcast %51 : vector<1x1xf32> to vector<2x1xf32>
    %53 = arith.addf %50, %52 : vector<2x1xf32>
    %54 = vector.shape_cast %53 : vector<2x1xf32> to vector<1x1x2xf32>
    %c0_29 = arith.constant 0 : index
    %c0_30 = arith.constant 0 : index
    %c0_31 = arith.constant 0 : index
    %55 = vector.load %arg7[%c0_29, %c0_30, %c0_31] : memref<1x1x2xf32, #tpu.memory_space<vmem>>, vector<1x1x2xf32>
    tpu.vector_store %arg7[%c0_29, %c0_30, %c0_31], %54 {strides = array<i32>} : memref<1x1x2xf32, #tpu.memory_space<vmem>>, vector<1x1x2xf32>,
    return
  }
  func.func @transform_0(%arg0: i32) -> (i32, i32, i32) {
    %c0_i32 = arith.constant 0 : i32
    %c0_i32_0 = arith.constant 0 : i32
    %c0_i32_1 = arith.constant 0 : i32
    return %arg0, %c0_i32, %c0_i32_0 : i32, i32, i32
  }
  func.func @transform_1(%arg0: i32) -> (i32, i32) {
    %c0_i32 = arith.constant 0 : i32
    %c0_i32_0 = arith.constant 0 : i32
    %c0_i32_1 = arith.constant 0 : i32
    return %c0_i32, %c0_i32_0 : i32, i32
  }
  func.func @transform_2(%arg0: i32) -> (i32, i32) {
    %c0_i32 = arith.constant 0 : i32
    %c0_i32_0 = arith.constant 0 : i32
    %c0_i32_1 = arith.constant 0 : i32
    return %c0_i32, %c0_i32_0 : i32, i32
  }
  func.func @transform_3(%arg0: i32) -> (i32, i32) {
    %c0_i32 = arith.constant 0 : i32
    %c0_i32_0 = arith.constant 0 : i32
    %c0_i32_1 = arith.constant 0 : i32
    return %c0_i32, %c0_i32_0 : i32, i32
  }
  func.func @transform_4(%arg0: i32) -> (i32, i32, i32) {
    %c0_i32 = arith.constant 0 : i32
    %c0_i32_0 = arith.constant 0 : i32
    %c0_i32_1 = arith.constant 0 : i32
    return %arg0, %c0_i32, %c0_i32_0 : i32, i32, i32
  }
  func.func @transform_5(%arg0: i32) -> (i32, i32, i32) {
    %c0_i32 = arith.constant 0 : i32
    %c0_i32_0 = arith.constant 0 : i32
    %c0_i32_1 = arith.constant 0 : i32
    return %arg0, %c0_i32, %c0_i32_0 : i32, i32, i32
  }
  func.func @transform_6(%arg0: i32) -> (i32, i32, i32) {
    %c0_i32 = arith.constant 0 : i32
    %c0_i32_0 = arith.constant 0 : i32
    %c0_i32_1 = arith.constant 0 : i32
    return %arg0, %c0_i32, %c0_i32_0 : i32, i32, i32
  }
}

</mosaic_0001>

<llo_original>
// kernel: prm_forward.1
$region0: #{prm_forward.1}
  #allocation0 [shape = 'u32[]', space=smem, size = 0x4, offset = 0x4, fixed_abs, tag = 'smem constant byte address 0x4 - core index']
  #allocation1 [shape = 'u32[72,128]{1,0:T(1,128)}', space=vmem, size = 0x9000, scoped, tag = 'internal scratch']
  %s0 = inlined_call_operand.vmem [shape: f32[2,8,64], index: 0, kind: input, shape index: {}]
  %s1 = inlined_call_operand.vmem [shape: bf16[64,80], index: 1, kind: input, shape index: {}]
  %s2 = inlined_call_operand.vmem [shape: bf16[48,2], index: 2, kind: input, shape index: {}]
  %s3 = inlined_call_operand.vmem [shape: f32[1,115], index: 3, kind: input, shape index: {}]
  %s4 = inlined_call_operand.vmem [shape: f32[1,1,16], index: 4, kind: output, shape index: {0}]
  %s5 = inlined_call_operand.vmem [shape: f32[1,1,16], index: 5, kind: output, shape index: {1}]
  %s6 = inlined_call_operand.hbm [shape: f32[1,1,2], index: 6, kind: output, shape index: {2}]
  %7 = xla_tuple %s4, %s5, %s6
  %s8 = sld [smem:[#allocation0]]
  $region42: #{prm_forward.1} parent=0
    _
  %s10 = ssub.s32 1, %s8
  %s11 = scalar_select 0, %s10, %s8
  $region1: #{prm_forward.1} parent=0
    #allocation2 [shape = 'u8[512]{0}', space=vmem, size = 0x400, scoped, tag = 'output window, operand 2, single buffered']
    #allocation3 [shape = 's32[1]{0}', space=sflag, size = 0x4, scoped, tag = 'scoped memory for prm_forward.1']
    %12 = vsyncpa [#allocation3], 0
    // Predicated region
    $region2: #{prm_forward.1} parent=1 // pred_check
      _
    $region3: #{prm_forward.1} parent=1 // pred_check_branch
      %14 = sbr.rel (0) target = $region5
    $region4: #{prm_forward.1} parent=1 // pred_region
      _
    $region5: #{prm_forward.1} parent=1 // pred_fallthru
      _
    // Predicated region
    $region6: #{prm_forward.1} parent=1 // pred_check
      _
    $region7: #{prm_forward.1} parent=1 // pred_check_branch
      %16 = sbr.rel (0) target = $region9
    $region8: #{prm_forward.1} parent=1 // pred_region
      _
    $region9: #{prm_forward.1} parent=1 // pred_fallthru
      _
    // Predicated region
    $region10: #{prm_forward.1} parent=1 // pred_check
      _
    $region11: #{prm_forward.1} parent=1 // pred_check_branch
      %18 = sbr.rel (0) target = $region13
    $region12: #{prm_forward.1} parent=1 // pred_region
      _
    $region13: #{prm_forward.1} parent=1 // pred_fallthru
      _
    // Predicated region
    $region14: #{prm_forward.1} parent=1 // pred_check
      _
    $region15: #{prm_forward.1} parent=1 // pred_check_branch
      %20 = sbr.rel (0) target = $region17
    $region16: #{prm_forward.1} parent=1 // pred_region
      _
    $region17: #{prm_forward.1} parent=1 // pred_fallthru
      _
    %v22 = vld [vmem:[%s0] sm:$0xff]
    %v23 = vld [vmem:[%s0 + $0x8] sm:$0xff]
    %v24 = vpack.c.bf16 %v23, %v22
    %v25 = vld [vmem:[%s1] sm:$0xf]
    %v26 = vld [vmem:[%s1 + $0x4] sm:$0xf]
    %v27 = vld [vmem:[%s1 + $0x8] sm:$0xf]
    %v28 = vld [vmem:[%s1 + $0xc] sm:$0xf]
    %v29 = vld [vmem:[%s1 + $0x10] sm:$0xf]
    %v30 = vld [vmem:[%s1 + $0x14] sm:$0xf]
    %v31 = vld [vmem:[%s1 + $0x18] sm:$0xf]
    %v32 = vld [vmem:[%s1 + $0x1c] sm:$0xf]
    %v33 = vld [vmem:[%s3] sm:$0x1]
    %v35 = vperm.slane %v33, 0
    %v45 = vunpack.c.l.b16 %v25
    %v46 = vunpack.c.l.b16 %v26
    %v47 = vunpack.c.l.b16 %v27
    %v48 = vunpack.c.l.b16 %v28
    %v49 = vunpack.c.l.b16 %v29
    %v50 = vunpack.c.l.b16 %v30
    %v51 = vunpack.c.l.b16 %v31
    %v52 = vunpack.c.l.b16 %v32
    %v53 = vpack.c.b16 %v46, %v45
    %v54 = vpack.c.b16 %v48, %v47
    %v55 = vpack.c.b16 %v50, %v49
    %v56 = vpack.c.b16 %v52, %v51
    %vm61 = vcmask 523264
    %v63 = vsel %vm61, %v24, 0
    %65 = vmatpush.bf16.msra.mxu0 0
    %66 = vmatpush.bf16.msra.mxu0 0
    %67 = vmatpush.bf16.msra.mxu0 0
    %68 = vmatpush.bf16.msra.mxu0 0
    %69 = vmatpush.bf16.msra.mxu0 %v56
    %70 = vmatpush.bf16.msra.mxu0 %v55
    %71 = vmatpush.bf16.msra.mxu0 %v54
    %72 = vmatpush.bf16.msra.mxu0 %v53
    %73 = vmatmul.bf16.gmra.mxu0 %v63
    %v74 = vpop.f32.mrf.mxu0
    %v75 = vadd.f32 %v35, %v74
    %v76 = vpop.f32.mrf.mxu0
    %v77 = vadd.f32 %v35, %v76
    %78 = vdwg.mxu0
    %v79 = vmax.f32 %v75, 0.0
    %v80 = vmax.f32 %v77, 0.0
    %v81 = vpack.c.bf16 %v80, %v79
    %v82 = vld [vmem:[%s2] sm:$0xf]
    %v83 = vld [vmem:[%s2 + $0x4] sm:$0xf]
    %v84 = vld [vmem:[%s2 + $0x8] sm:$0xf]
    %v85 = vld [vmem:[%s2 + $0xc] sm:$0xf]
    %v86 = vld [vmem:[%s2 + $0x10] sm:$0xf]
    %v87 = vld [vmem:[%s2 + $0x14] sm:$0xf]
    %v94 = vunpack.c.l.b16 %v82
    %v95 = vunpack.c.l.b16 %v83
    %v96 = vunpack.c.l.b16 %v84
    %v97 = vunpack.c.l.b16 %v85
    %v98 = vunpack.c.l.b16 %v86
    %v99 = vunpack.c.l.b16 %v87
    %v100 = vpack.c.b16 %v95, %v94
    %v101 = vpack.c.b16 %v97, %v96
    %v102 = vpack.c.b16 %v99, %v98
    %106 = vrot.lane.b32.xlu0 %v35, 80
    %v107 = vpop.permute.xlu0 %106
    %vm109 = vcmask 392192
    %v111 = vsel %vm109, %v81, 0
    %113 = vmatpush.bf16.msra.mxu0 0
    %114 = vmatpush.bf16.msra.mxu0 0
    %115 = vmatpush.bf16.msra.mxu0 0
    %116 = vmatpush.bf16.msra.mxu0 0
    %117 = vmatpush.bf16.msra.mxu0 0
    %118 = vmatpush.bf16.msra.mxu0 %v102
    %119 = vmatpush.bf16.msra.mxu0 %v101
    %120 = vmatpush.bf16.msra.mxu0 %v100
    %121 = vmatmul.bf16.gmra.mxu0 %v111
    %v122 = vpop.f32.mrf.mxu0
    %v123 = vadd.f32 %v107, %v122
    %v124 = vpop.f32.mrf.mxu0
    %v125 = vadd.f32 %v107, %v124
    %126 = vdwg.mxu0
    %v127 = vxor.u32 %v123, 2147483648
    %v128 = vxor.u32 %v125, 2147483648
    %v129 = vmul.f32 %v127, 1.442695
    %v130 = vpow.pop %v129
    %v131 = vmul.f32 %v128, 1.442695
    %v132 = vpow.pop %v131
    %v133 = vadd.f32 %v130, 1.0
    %v134 = vadd.f32 %v132, 1.0
    %v135 = vrcp.pop %v133
    %v136 = vmul.f32 %v133, %v135
    %v137 = vsub.f32 1.0, %v136
    %v138 = vmul.f32 %v135, %v137
    %v139 = vadd.f32 %v135, %v138
    %vm140 = vweird.f32 %v133
    %vm141 = vweird.f32 %v135
    %vm142 = vmor %vm140, %vm141
    %v143 = vsel %vm142, %v135, %v139
    %v144 = vand.u32 2147483647, %v133
    %vm145 = vcmp.eq.f32.partialorder %v144, 8.507059e+37
    %v146 = vand.u32 %v133, 2147483648
    %v147 = vor.u32 1.1754944e-38, %v146
    %v148 = vsel %vm145, %v147, %v143
    %v149 = vmul.f32 1.0, %v148
    %v150 = vrcp.pop %v134
    %v151 = vmul.f32 %v134, %v150
    %v152 = vsub.f32 1.0, %v151
    %v153 = vmul.f32 %v150, %v152
    %v154 = vadd.f32 %v150, %v153
    %vm155 = vweird.f32 %v134
    %vm156 = vweird.f32 %v150
    %vm157 = vmor %vm155, %vm156
    %v158 = vsel %vm157, %v150, %v154
    %v159 = vand.u32 2147483647, %v134
    %vm160 = vcmp.eq.f32.partialorder %v159, 8.507059e+37
    %v161 = vand.u32 %v134, 2147483648
    %v162 = vor.u32 1.1754944e-38, %v161
    %v163 = vsel %vm160, %v162, %v158
    %v164 = vmul.f32 1.0, %v163
    %167 = vset.pattern.permute.xlu0 0
    %168 = vperm.xlu0 %167, %v123
    %v169 = vpop.permute.xlu0 %168
    %170 = vset.pattern.permute.xlu0 0
    %171 = vperm.xlu0 %170, %v125
    %v172 = vpop.permute.xlu0 %171
    %v173 = vlaneseq
    %v174 = vand.u32 %v173, 127
    %v175 = vperm.slane %v169, %v174
    %v176 = vadd.s32 %v174, 4294967288
    %v177 = vperm.slane %v172, %v176
    %vm178 = vcmask 130112
    %v179 = vsel %vm178, %v177, %v175
    %vm181 = vcmask 122880
    %182 = vst.msk [vmem:[%s4] sm:$0x1] %vm181, %v179
    %185 = vset.pattern.permute.xlu0 1
    %186 = vperm.xlu0 %185, %v149
    %v187 = vpop.permute.xlu0 %186
    %188 = vset.pattern.permute.xlu0 1
    %189 = vperm.xlu0 %188, %v164
    %v190 = vpop.permute.xlu0 %189
    %v191 = vperm.slane %v187, %v174
    %v192 = vperm.slane %v190, %v176
    %v193 = vsel %vm178, %v192, %v191
    %195 = vst.msk [vmem:[%s5] sm:$0x1] %vm181, %v193
    %v196 = vmul.f32 %v149, 1.442695
    %v197 = vpow.pop %v196
    %v198 = vmul.f32 %v164, 1.442695
    %v199 = vpow.pop %v198
    %vm200 = vcmask 15368
    %v201 = vsel %vm200, %v197, 0.0
    %v202 = vrot.slane %v201, 4
    %v203 = vadd.f32 %v201, %v202
    %v204 = vrot.slane %v203, 2
    %v205 = vadd.f32 %v203, %v204
    %v206 = vrot.slane %v205, 1
    %v207 = vadd.f32 %v205, %v206
    %v208 = vsel %vm200, %v199, 0.0
    %v209 = vrot.slane %v208, 4
    %v210 = vadd.f32 %v208, %v209
    %v211 = vrot.slane %v210, 2
    %v212 = vadd.f32 %v210, %v211
    %v213 = vrot.slane %v212, 1
    %v214 = vadd.f32 %v212, %v213
    %v215 = vrcp.pop %v207
    %v216 = vmul.f32 %v207, %v215
    %v217 = vsub.f32 1.0, %v216
    %v218 = vmul.f32 %v215, %v217
    %v219 = vadd.f32 %v215, %v218
    %vm220 = vweird.f32 %v207
    %vm221 = vweird.f32 %v215
    %vm222 = vmor %vm220, %vm221
    %v223 = vsel %vm222, %v215, %v219
    %v224 = vand.u32 2147483647, %v207
    %vm225 = vcmp.eq.f32.partialorder %v224, 8.507059e+37
    %v226 = vand.u32 %v207, 2147483648
    %v227 = vor.u32 1.1754944e-38, %v226
    %v228 = vsel %vm225, %v227, %v223
    %v229 = vmul.f32 1.0, %v228
    %v230 = vrcp.pop %v214
    %v231 = vmul.f32 %v214, %v230
    %v232 = vsub.f32 1.0, %v231
    %v233 = vmul.f32 %v230, %v232
    %v234 = vadd.f32 %v230, %v233
    %vm235 = vweird.f32 %v214
    %vm236 = vweird.f32 %v230
    %vm237 = vmor %vm235, %vm236
    %v238 = vsel %vm237, %v230, %v234
    %v239 = vand.u32 2147483647, %v214
    %vm240 = vcmp.eq.f32.partialorder %v239, 8.507059e+37
    %v241 = vand.u32 %v214, 2147483648
    %v242 = vor.u32 1.1754944e-38, %v241
    %v243 = vsel %vm240, %v242, %v238
    %v244 = vmul.f32 1.0, %v243
    %v245 = vmul.f32 %v197, %v229
    %v246 = vmul.f32 %v199, %v244
    %248 = vset.pattern.permute.xlu0 1
    %249 = vperm.xlu0 %248, %v245
    %v250 = vpop.permute.xlu0 %249
    %253 = vset.pattern.permute.xlu0 1
    %254 = vperm.xlu0 %253, %v246
    %v255 = vpop.permute.xlu0 %254
    %v257 = vmul.f32 %v22, %v250
    %v258 = vmul.f32 %v23, %v255
    %v259 = vsel %vm61, %v257, 0.0
    %v260 = vrot.slane %v259, 4
    %v261 = vadd.f32 %v259, %v260
    %v262 = vrot.slane %v261, 2
    %v263 = vadd.f32 %v261, %v262
    %v264 = vrot.slane %v263, 1
    %v265 = vadd.f32 %v263, %v264
    %v266 = vsel %vm61, %v258, 0.0
    %v267 = vrot.slane %v266, 4
    %v268 = vadd.f32 %v266, %v267
    %v269 = vrot.slane %v268, 2
    %v270 = vadd.f32 %v268, %v269
    %v271 = vrot.slane %v270, 1
    %v272 = vadd.f32 %v270, %v271
    %v273 = vpack.c.bf16 %v265, %v265
    %v274 = vpack.c.bf16 %v272, %v272
    %v275 = vld [vmem:[%s1] sm:$0xf]
    %v276 = vld [vmem:[%s1 + $0x4] sm:$0xf]
    %v277 = vld [vmem:[%s1 + $0x8] sm:$0xf]
    %v278 = vld [vmem:[%s1 + $0xc] sm:$0xf]
    %v279 = vld [vmem:[%s1 + $0x10] sm:$0xf]
    %v280 = vld [vmem:[%s1 + $0x14] sm:$0xf]
    %v281 = vld [vmem:[%s1 + $0x18] sm:$0xf]
    %v282 = vld [vmem:[%s1 + $0x1c] sm:$0xf]
    %v283 = vld [vmem:[%s3] sm:$0x1]
    %v285 = vperm.slane %v283, 0
    %v288 = vunpack.c.l.b16 %v273
    %v289 = vunpack.c.l.b16 %v274
    %vm290 = vcmask 1041409
    %v291 = vsel %vm290, %v289, %v288
    %v292 = vpack.c.b16 %v291, %v291
    %v301 = vunpack.c.l.b16 %v275
    %v302 = vunpack.c.l.b16 %v276
    %v303 = vunpack.c.l.b16 %v277
    %v304 = vunpack.c.l.b16 %v278
    %v305 = vunpack.c.l.b16 %v279
    %v306 = vunpack.c.l.b16 %v280
    %v307 = vunpack.c.l.b16 %v281
    %v308 = vunpack.c.l.b16 %v282
    %v309 = vpack.c.b16 %v302, %v301
    %v310 = vpack.c.b16 %v304, %v303
    %v311 = vpack.c.b16 %v306, %v305
    %v312 = vpack.c.b16 %v308, %v307
    %313 = vrot.lane.b32.xlu0 %v309, 80
    %v314 = vpop.permute.xlu0 %313
    %315 = vrot.lane.b32.xlu0 %v310, 80
    %v316 = vpop.permute.xlu0 %315
    %317 = vrot.lane.b32.xlu0 %v311, 80
    %v318 = vpop.permute.xlu0 %317
    %319 = vrot.lane.b32.xlu0 %v312, 80
    %v320 = vpop.permute.xlu0 %319
    %325 = vrot.lane.b32.xlu0 %v285, 78
    %v326 = vpop.permute.xlu0 %325
    %v329 = vsel %vm61, %v292, 0
    %331 = vmatpush.bf16.msra.mxu0 0
    %332 = vmatpush.bf16.msra.mxu0 0
    %333 = vmatpush.bf16.msra.mxu0 0
    %334 = vmatpush.bf16.msra.mxu0 0
    %335 = vmatpush.bf16.msra.mxu0 %v320
    %336 = vmatpush.bf16.msra.mxu0 %v318
    %337 = vmatpush.bf16.msra.mxu0 %v316
    %338 = vmatpush.bf16.msra.mxu0 %v314
    %339 = vmatmul.bf16.gmra.mxu0 %v329
    %v340 = vpop.f32.mrf.mxu0
    %v341 = vadd.f32 %v326, %v340
    %v342 = vpop.f32.mrf.mxu0
    %343 = vdwg.mxu0
    %v344 = vmax.f32 %v341, 0.0
    %345 = vrot.lane.b32.xlu0 %v285, 45
    %v346 = vpop.permute.xlu0 %345
    %v348 = vmul.f32 %v344, %v346
    %vm349 = vcmask 254976
    %v350 = vsel %vm349, %v348, 0.0
    %351 = vadd.xlane.f32.xlu0 %v350
    %v352 = vpop.xlane.xlu0 %351
    %v354 = vadd.f32 %v352, %v285
    %356 = vset.pattern.permute.xlu0 82
    %357 = vperm.xlu0 %356, %v354
    %v358 = vpop.permute.xlu0 %357
    %v359 = vperm.slane %v358, %v174
    %vm361 = vcmask 8192
    %362 = vst.msk [vmem:[#allocation2] sm:$0x1] %vm361, %v359
    // Predicated region
    $region18: #{prm_forward.1} parent=1 // pred_check
      _
    $region19: #{prm_forward.1} parent=1 // pred_check_branch
      %364 = sbr.rel (0) target = $region21
    $region20: #{prm_forward.1} parent=1 // pred_region
      _
    $region21: #{prm_forward.1} parent=1 // pred_fallthru
      _
    // Predicated region
    $region22: #{prm_forward.1} parent=1 // pred_check
      _
    $region23: #{prm_forward.1} parent=1 // pred_check_branch
      %366 = sbr.rel (0) target = $region25
    $region24: #{prm_forward.1} parent=1 // pred_region
      _
    $region25: #{prm_forward.1} parent=1 // pred_fallthru
      _
    // Predicated region
    $region26: #{prm_forward.1} parent=1 // pred_check
      _
    $region27: #{prm_forward.1} parent=1 // pred_check_branch
      %368 = sbr.rel (0) target = $region29
    $region28: #{prm_forward.1} parent=1 // pred_region
      %370 = vsyncadd [#allocation3], 0
      %s372 = sshll.u32 [#allocation2], 4
      %s373 = int_to_ptr.vmem [resolvable:$true] %s372
      %s374 = sshll.u32 %s6, 4
      %s375 = int_to_ptr.hbm [resolvable:$true] %s374
      %377 = dma.vmem_to_hbm [thread:$0]  %s373, 16, %s375, [#allocation3]
    $region29: #{prm_forward.1} parent=1 // pred_fallthru
      _
    // Predicated region
    $region30: #{prm_forward.1} parent=1 // pred_check
      _
    $region31: #{prm_forward.1} parent=1 // pred_check_branch
      %379 = sbr.rel (0) target = $region33
    $region32: #{prm_forward.1} parent=1 // pred_region
      _
    $region33: #{prm_forward.1} parent=1 // pred_fallthru
      _
    // Predicated region
    $region34: #{prm_forward.1} parent=1 // pred_check
      _
    $region35: #{prm_forward.1} parent=1 // pred_check_branch
      %381 = sbr.rel (0) target = $region37
    $region36: #{prm_forward.1} parent=1 // pred_region
      _
    $region37: #{prm_forward.1} parent=1 // pred_fallthru
      _
    // Predicated region
    $region38: #{prm_forward.1} parent=1 // pred_check
      _
    $region39: #{prm_forward.1} parent=1 // pred_check_branch
      %383 = sbr.rel (0) target = $region41
    $region40: #{prm_forward.1} parent=1 // pred_region
      %385 = dma.done [#allocation3], 16
    $region41: #{prm_forward.1} parent=1 // pred_fallthru
      _
    %386 = vsyncpa [#allocation3], 1

</llo_original>
